<compile_context>
chip_gen: v6e
topology: v6e:2x2x1
jax: 0.10.0
libtpu: 0.0.40
codegen_flags: <defaults>
</compile_context>

<pallas_src>
import functools

import jax
import jax.numpy as jnp
from jax.experimental import pallas as pl
from jax.experimental.pallas import tpu as pltpu


def _cdiv(a, b):
    return (a + b - 1) // b


def _round_up(x, m):
    return _cdiv(x, m) * m


def _tpu_vmem_budget():
    """Return (tile-sizing budget, scoped vmem limit) in bytes, per TensorCore."""
    cap = 64 * 1024 * 1024                      # conservative fallback (v7x per-TC)
    try:
        cap = int(pltpu.get_tpu_info().vmem_capacity_bytes)
    except Exception:
        pass
    kind = ""
    try:
        kind = jax.devices()[0].device_kind.lower()
    except Exception:
        pass
    if "v7" in kind:                            # 64 MiB per TC, even if reported per chip
        cap = min(cap, 64 * 1024 * 1024)
    limit = min(cap * 3 // 4, 100 * 1024 * 1024)   # ~96 MiB v5e/v6e, ~48 MiB v7x
    budget = limit // 2
    return budget, limit


def _default_num_chunks():
    """Leading 'parallel' grid axis: 2 on dual-TensorCore chips (v7x), else 1."""
    try:
        kind = jax.devices()[0].device_kind.lower()
    except Exception:
        return 1
    return 2 if "v7" in kind else 1


# ---------------------------------------------------------------------------
# Kernel: masked, label-smoothed cross-entropy partial sums.
# ---------------------------------------------------------------------------

def _masked_ce_kernel(logits_ref, tgt_ref, loss_ref, *, label_smoothing):
    """One token tile: log-softmax + label-smoothed NLL, masked accumulate.

    grid = (chunks, steps).  The (1, 1, 128) output block is resident across
    the inner "arbitrary" step axis and distinct per "parallel" chunk, so each
    chunk accumulates its own partial sum.  Targets < 0 mark tokens excluded
    from the loss (this also masks ragged / out-of-bounds rows, whose logits
    may contain garbage but never leak into the sum).
    """
    step = pl.program_id(1)

    @pl.when(step == 0)
    def _():
        loss_ref[...] = jnp.zeros_like(loss_ref)

    logits = logits_ref[...].astype(jnp.float32)             # [TM, C]
    t = tgt_ref[...]                                          # [TM, 1] int32

    num_classes = logits.shape[-1]
    cls = jax.lax.broadcasted_iota(jnp.int32, logits.shape, 1)

    # TODO(synk): on v7x, if bundle dumps show the XLU slot binding, these lane
    # reductions could be offloaded to the idle MXU via jnp.dot(x, ones).
    mx = jnp.max(logits, axis=-1, keepdims=True)              # [TM, 1]
    ex = jnp.exp(logits - mx)
    lse = jnp.log(jnp.sum(ex, axis=-1, keepdims=True)) + mx   # logsumexp [TM, 1]

    # Select-and-sum (no f32 one-hot: saves a whole-tile convert + multiply).
    tgt_logit = jnp.sum(jnp.where(cls == t, logits, 0.0), axis=-1, keepdims=True)
    logp_t = tgt_logit - lse                                   # [TM, 1]

    eps = float(label_smoothing)
    if eps != 0.0:   # static: whole branch disappears when smoothing is off
        sum_logp = jnp.sum(logits, axis=-1, keepdims=True) - num_classes * lse
        per_tok = -(1.0 - eps) * logp_t - (eps / num_classes) * sum_logp
    else:
        per_tok = -logp_t                                      # [TM, 1]

    keep = t >= 0
    loss_ref[...] += jnp.sum(jnp.where(keep, per_tok, 0.0))    # broadcast scalar


def masked_cross_entropy_sum(logits, tgt_or_neg, *, label_smoothing=0.0,
                             num_chunks=None, max_tm=1024):
    """Sum over tokens with tgt >= 0 of label-smoothed CE(logits[i], tgt[i]).

    logits:      [N, C] in native dtype (e.g. bf16), UNPADDED; cast in-kernel.
    tgt_or_neg:  [N] int; negative entries are excluded from the sum.
    Returns a float32 scalar (the SUM; divide by the count in the caller).
    """
    n, c = logits.shape
    bytes_in = jnp.dtype(logits.dtype).itemsize
    budget, vmem_limit = _tpu_vmem_budget()

    # Token-tile sizing: double-buffered native-dtype logits + ~3 f32 whole-tile
    # intermediates per row; tm rounded to the dtype's sublane packing.
    gran = max(16, 32 // bytes_in)
    per_row_bytes = c * (2 * bytes_in + 3 * 4)
    rows_fit = max(gran, (budget // per_row_bytes) // gran * gran)
    tm = min(max_tm, rows_fit, _round_up(n, gran))
    tm = max(gran, (tm // gran) * gran)

    n_tiles = _cdiv(n, tm)
    chunks = _default_num_chunks() if num_chunks is None else num_chunks
    chunks = max(1, min(chunks, n_tiles))
    steps = _cdiv(n_tiles, chunks)
    cover = chunks * steps               # grid tiles (>= n_tiles by < chunks)
    np_ = cover * tm

    # Only the tiny int32 target column gets padded (-1 == excluded); the big
    # logits array stays untouched in HBM.
    tg = tgt_or_neg.astype(jnp.int32)
    if np_ > n:
        tg = jnp.pad(tg, (0, np_ - n), constant_values=-1)
    tg = tg.reshape(np_, 1)

    last_blk = n_tiles - 1

    def logits_map(ci, si):
        # Clamp duplicate over-coverage tiles onto the last real tile (their
        # padded targets are all -1, so they contribute zero).
        return (jnp.minimum(ci * steps + si, last_blk), 0)

    def tgt_map(ci, si):
        return (ci * steps + si, 0)

    kernel = functools.partial(_masked_ce_kernel, label_smoothing=label_smoothing)
    partial_sums = pl.pallas_call(
        kernel,
        out_shape=jax.ShapeDtypeStruct((chunks, 1, 128), jnp.float32),
        grid_spec=pltpu.PrefetchScalarGridSpec(
            num_scalar_prefetch=0,
            grid=(chunks, steps),
            in_specs=[
                pl.BlockSpec((tm, c), logits_map),   # class block = full dim
                pl.BlockSpec((tm, 1), tgt_map),
            ],
            out_specs=pl.BlockSpec((1, 1, 128), lambda ci, si: (ci, 0, 0)),
        ),
        compiler_params=pltpu.CompilerParams(
            dimension_semantics=("parallel", "arbitrary"),
            vmem_limit_bytes=vmem_limit),
    )(logits, tg)
    return jnp.sum(partial_sums[:, 0, 0])


# ---------------------------------------------------------------------------
# CETwoLoss forward (bookkeeping + tiny tag head in plain JAX, vocab CE in the
# Pallas kernel).
# ---------------------------------------------------------------------------

def _masked_mean_ce_jnp(logits, targets, sel, label_smoothing):
    """Plain-JAX masked-mean CE (matches torch.nn.CrossEntropyLoss w/ smoothing)."""
    lp = jax.nn.log_softmax(logits.astype(jnp.float32), axis=-1)
    idx = jnp.clip(targets, 0, logits.shape[-1] - 1)
    nll = -jnp.take_along_axis(lp, idx[:, None], axis=-1)[:, 0]
    smooth = -jnp.mean(lp, axis=-1)
    per = (1.0 - label_smoothing) * nll + label_smoothing * smooth
    cnt = jnp.sum(sel)
    return jnp.sum(jnp.where(sel, per, 0.0)) / jnp.maximum(cnt, 1), cnt


def _prepare_selections(out, tgt, mask, x, tagger, mask_keep_prob, rng):
    assert 'voc_out' in out
    tag_out = out['tag_out']                       # [B, S, n_tags]
    voc_out = out['voc_out']                       # [B, S, n_voc]
    att_out = out['attention_mask']                # [B, S]
    att_in = x['tag_data']['attention_mask']       # [B, S]
    b, s, n_tags = tag_out.shape
    n_voc = voc_out.shape[-1]

    batch_m = mask.astype(bool)[:, None]                          # [B, 1]
    # TODO(synk): the reference pairs att_mask_out-selected logits with
    # att_mask_in-selected targets positionally after boolean indexing; here
    # the two attention masks are assumed to select the same positions (true
    # for GecBertVocModel), so selection is expressed as one combined mask.
    valid = batch_m & att_out.astype(bool) & att_in.astype(bool)  # [B, S]

    t = tgt.astype(jnp.int32)
    t_tag = jnp.take(tagger['id_to_tag_id'], t, axis=0)           # [B, S]
    t_word = jnp.take(tagger['id_to_word_id'], t, axis=0)         # [B, S]

    rand = jax.random.uniform(rng, t.shape)
    keep_mask = (t_tag != 0) | (rand > mask_keep_prob)

    tag_sel = (valid & keep_mask).reshape(-1)
    voc_sel = (valid & (t_word != -1)).reshape(-1)
    return (tag_out.reshape(b * s, n_tags), t_tag.reshape(-1), tag_sel,
            voc_out.reshape(b * s, n_voc), t_word.reshape(-1), voc_sel)


def ce_two_loss_forward(out, tgt, mask, x, tagger, mask_keep_prob=0.0, *,
                        label_smoothing=0.0, beta=1.0, rng=None):
    """JAX/Pallas equivalent of CETwoLoss.forward."""
    if rng is None:
        rng = jax.random.PRNGKey(1)
    (tag_lg, t_tag, tag_sel, voc_lg, t_word, voc_sel) = _prepare_selections(
        out, tgt, mask, x, tagger, mask_keep_prob, rng)

    # --- tag loss: tiny class dim (<< 128 lanes) => plain XLA, no kernel -----
    loss_tag, _ = _masked_mean_ce_jnp(tag_lg, t_tag, tag_sel, label_smoothing)

    # --- vocabulary loss: the big head goes through the Pallas kernel --------
    voc_tgt = jnp.where(voc_sel, t_word, -1)       # negative => excluded
    voc_sum = masked_cross_entropy_sum(voc_lg, voc_tgt,
                                       label_smoothing=label_smoothing)
    cnt_voc = jnp.sum(voc_sel)
    loss_voc = jnp.where(
        cnt_voc > 0, voc_sum / jnp.maximum(cnt_voc, 1).astype(jnp.float32), 0.0)

    return loss_tag + beta * loss_voc


def ce_two_loss_reference(out, tgt, mask, x, tagger, mask_keep_prob=0.0, *,
                          label_smoothing=0.0, beta=1.0, rng=None):
    """Pure-JAX reference (same selection logic, jax.nn.log_softmax CE)."""
    if rng is None:
        rng = jax.random.PRNGKey(1)
    (tag_lg, t_tag, tag_sel, voc_lg, t_word, voc_sel) = _prepare_selections(
        out, tgt, mask, x, tagger, mask_keep_prob, rng)
    loss_tag, _ = _masked_mean_ce_jnp(tag_lg, t_tag, tag_sel, label_smoothing)
    loss_voc, cnt_voc = _masked_mean_ce_jnp(voc_lg, t_word, voc_sel, label_smoothing)
    loss_voc = jnp.where(cnt_voc > 0, loss_voc, 0.0)
    return loss_tag + beta * loss_voc


if __name__ == "__main__":
    key = jax.random.PRNGKey(0)
    k0, k1, k2, k3, k4, k5, k6 = jax.random.split(key, 7)

    # --- 1. Direct kernel check with ragged tiles: n=40, tm forced to 16 so
    #        the grid has full tiles + a partial last tile (and a clamped
    #        duplicate tile when chunks=2 on dual-TC chips). -------------------
    Nr, Cr = 40, 32
    lg_r = jax.random.normal(k0, (Nr, Cr), jnp.float32).astype(jnp.bfloat16)
    tg_r = jax.random.randint(k6, (Nr,), -1, Cr, jnp.int32)   # some excluded
    got = masked_cross_entropy_sum(lg_r, tg_r, label_smoothing=0.1, max_tm=16)
    got = jax.block_until_ready(got)

    lp_r = jax.nn.log_softmax(lg_r.astype(jnp.float32), axis=-1)
    idx_r = jnp.clip(tg_r, 0, Cr - 1)
    nll_r = -jnp.take_along_axis(lp_r, idx_r[:, None], axis=-1)[:, 0]
    per_r = 0.9 * nll_r + 0.1 * (-jnp.mean(lp_r, axis=-1))
    want = jnp.sum(jnp.where(tg_r >= 0, per_r, 0.0))
    assert jnp.isfinite(got)
    assert jnp.allclose(got, want, rtol=1e-3, atol=1e-3), (got, want)

    # --- 2. Full CETwoLoss forward vs pure-JAX reference ----------------------
    B, S, N_TAGS, N_VOC = 2, 16, 8, 32
    tag_out = jax.random.normal(k1, (B, S, N_TAGS), jnp.float32).astype(jnp.bfloat16)
    voc_out = jax.random.normal(k2, (B, S, N_VOC), jnp.float32).astype(jnp.bfloat16)

    lengths = jnp.array([12, 9], jnp.int32)
    pos = jnp.arange(S)[None, :]
    attention_mask = (pos < lengths[:, None]).astype(jnp.int32)    # [B, S]

    # Combined-id tagger tables: ids [0, N_TAGS) are pure tag ops (word id -1),
    # ids [N_TAGS, N_TAGS + N_VOC) are vocabulary ops (tag id N_TAGS - 1).
    id_to_tag_id = jnp.concatenate([
        jnp.arange(N_TAGS, dtype=jnp.int32),
        jnp.full((N_VOC,), N_TAGS - 1, jnp.int32)])
    id_to_word_id = jnp.concatenate([
        jnp.full((N_TAGS,), -1, jnp.int32),
        jnp.arange(N_VOC, dtype=jnp.int32)])
    tagger = {'id_to_tag_id': id_to_tag_id, 'id_to_word_id': id_to_word_id}

    tgt = jax.random.randint(k3, (B, S), 0, N_TAGS + N_VOC, jnp.int32)
    tgt = tgt * (jax.random.uniform(k4, (B, S)) > 0.4)             # sprinkle KEEP

    batch_mask = jnp.array([True, True])
    out = {'tag_out': tag_out, 'voc_out': voc_out,
           'attention_mask': attention_mask}
    x = {'tag_data': {'attention_mask': attention_mask}}

    loss = ce_two_loss_forward(out, tgt, batch_mask, x, tagger,
                               mask_keep_prob=0.0,
                               label_smoothing=0.1, beta=0.5, rng=k5)
    loss = jax.block_until_ready(loss)

    loss_ref = ce_two_loss_reference(out, tgt, batch_mask, x, tagger,
                                     mask_keep_prob=0.0,
                                     label_smoothing=0.1, beta=0.5, rng=k5)
    loss_ref = jax.block_until_ready(loss_ref)

    assert jnp.isfinite(loss)
    assert jnp.allclose(loss, loss_ref, rtol=1e-3, atol=1e-3), (loss, loss_ref)
    print("KERNEL_OK")
</pallas_src>

<mosaic_0001>
module attributes {stable_mosaic.version = 11 : i64} {
  func.func @_masked_ce_kernel(%arg0: i32, %arg1: i32, %arg2: memref<16x32xbf16, #tpu.memory_space<vmem>>, %arg3: memref<16x1xi32, #tpu.memory_space<vmem>>, %arg4: memref<1x1x128xf32, #tpu.memory_space<vmem>>) attributes {dimension_semantics = [#tpu.dimension_semantics<parallel>, #tpu.dimension_semantics<arbitrary>], iteration_bounds = array<i64: 1, 3>, scalar_prefetch = 0 : i64, scratch_operands = 0 : i64, tpu.core_type = #tpu.core_type<tc>, window_params = [{transform_indices = @transform_0, window_bounds = array<i64: 16, 32>}, {transform_indices = @transform_1, window_bounds = array<i64: 16, 1>}, {transform_indices = @transform_2, window_bounds = array<i64: 1, 1, 128>}]} {
    %c0_i32 = arith.constant 0 : i32
    %0 = arith.cmpi eq, %arg1, %c0_i32 : i32
    %1 = arith.extui %0 : i1 to i32
    %c0_i32_0 = arith.constant 0 : i32
    %2 = arith.cmpi ne, %1, %c0_i32_0 : i32
    scf.if %2 {
      %cst_20 = arith.constant 0.000000e+00 : f32
      %45 = vector.broadcast %cst_20 : f32 to vector<1x1x128xf32>
      %c0_21 = arith.constant 0 : index
      %c0_22 = arith.constant 0 : index
      %c0_23 = arith.constant 0 : index
      %46 = vector.load %arg4[%c0_21, %c0_22, %c0_23] : memref<1x1x128xf32, #tpu.memory_space<vmem>>, vector<1x1x128xf32>
      tpu.vector_store %arg4[%c0_21, %c0_22, %c0_23], %45 {strides = array<i32>} : memref<1x1x128xf32, #tpu.memory_space<vmem>>, vector<1x1x128xf32>,
    } else {
    }
    %c0 = arith.constant 0 : index
    %c0_1 = arith.constant 0 : index
    %3 = vector.load %arg2[%c0, %c0_1] : memref<16x32xbf16, #tpu.memory_space<vmem>>, vector<16x32xbf16>
    %4 = arith.extf %3 : vector<16x32xbf16> to vector<16x32xf32>
    %c0_2 = arith.constant 0 : index
    %c0_3 = arith.constant 0 : index
    %5 = vector.load %arg3[%c0_2, %c0_3] : memref<16x1xi32, #tpu.memory_space<vmem>>, vector<16x1xi32>
    %6 = tpu.iota {dimensions = array<i32: 1>} : vector<16x32xi32>
    %cst = arith.constant dense<0xFF800000> : vector<16xf32>
    %7 = vector.multi_reduction <maximumf>, %4, %cst [1] : vector<16x32xf32> to vector<16xf32>
    %8 = vector.shape_cast %7 : vector<16xf32> to vector<16x1xf32>
    %9 = vector.broadcast %8 : vector<16x1xf32> to vector<16x32xf32>
    %10 = arith.subf %4, %9 : vector<16x32xf32>
    %11 = math.exp %10 : vector<16x32xf32>
    %cst_4 = arith.constant dense<0.000000e+00> : vector<16xf32>
    %12 = vector.multi_reduction <add>, %11, %cst_4 [1] : vector<16x32xf32> to vector<16xf32>
    %13 = vector.shape_cast %12 : vector<16xf32> to vector<16x1xf32>
    %14 = math.log %13 : vector<16x1xf32>
    %15 = arith.addf %14, %8 : vector<16x1xf32>
    %16 = vector.broadcast %5 : vector<16x1xi32> to vector<16x32xi32>
    %17 = arith.cmpi eq, %6, %16 : vector<16x32xi32>
    %cst_5 = arith.constant 0.000000e+00 : f32
    %18 = vector.broadcast %cst_5 : f32 to vector<16x32xf32>
    %19 = arith.select %17, %4, %18 : vector<16x32xi1>, vector<16x32xf32>
    %cst_6 = arith.constant dense<0.000000e+00> : vector<16xf32>
    %20 = vector.multi_reduction <add>, %19, %cst_6 [1] : vector<16x32xf32> to vector<16xf32>
    %21 = vector.shape_cast %20 : vector<16xf32> to vector<16x1xf32>
    %22 = arith.subf %21, %15 : vector<16x1xf32>
    %cst_7 = arith.constant dense<0.000000e+00> : vector<16xf32>
    %23 = vector.multi_reduction <add>, %4, %cst_7 [1] : vector<16x32xf32> to vector<16xf32>
    %24 = vector.shape_cast %23 : vector<16xf32> to vector<16x1xf32>
    %cst_8 = arith.constant 3.200000e+01 : f32
    %25 = vector.broadcast %cst_8 : f32 to vector<16x1xf32>
    %26 = arith.mulf %25, %15 : vector<16x1xf32>
    %27 = arith.subf %24, %26 : vector<16x1xf32>
    %cst_9 = arith.constant -0.899999976 : f32
    %28 = vector.broadcast %cst_9 : f32 to vector<16x1xf32>
    %29 = arith.mulf %28, %22 : vector<16x1xf32>
    %cst_10 = arith.constant 3.125000e-03 : f32
    %30 = vector.broadcast %cst_10 : f32 to vector<16x1xf32>
    %31 = arith.mulf %30, %27 : vector<16x1xf32>
    %32 = arith.subf %29, %31 : vector<16x1xf32>
    %c0_i32_11 = arith.constant 0 : i32
    %33 = vector.broadcast %c0_i32_11 : i32 to vector<16x1xi32>
    %34 = arith.cmpi sge, %5, %33 : vector<16x1xi32>
    %c0_12 = arith.constant 0 : index
    %c0_13 = arith.constant 0 : index
    %c0_14 = arith.constant 0 : index
    %35 = vector.load %arg4[%c0_12, %c0_13, %c0_14] : memref<1x1x128xf32, #tpu.memory_space<vmem>>, vector<1x1x128xf32>
    %cst_15 = arith.constant 0.000000e+00 : f32
    %36 = vector.broadcast %cst_15 : f32 to vector<16x1xf32>
    %37 = arith.select %34, %32, %36 : vector<16x1xi1>, vector<16x1xf32>
    %38 = vector.shape_cast %37 : vector<16x1xf32> to vector<1x16x1xf32>
    %cst_16 = arith.constant dense<0.000000e+00> : vector<1xf32>
    %39 = vector.multi_reduction <add>, %38, %cst_16 [1, 2] : vector<1x16x1xf32> to vector<1xf32>
    %40 = vector.shape_cast %39 : vector<1xf32> to vector<1x1x1xf32>
    %41 = vector.extract %40[0, 0, 0] : f32 from vector<1x1x1xf32>
    %42 = vector.broadcast %41 : f32 to vector<1x1x128xf32>
    %43 = arith.addf %35, %42 : vector<1x1x128xf32>
    %c0_17 = arith.constant 0 : index
    %c0_18 = arith.constant 0 : index
    %c0_19 = arith.constant 0 : index
    %44 = vector.load %arg4[%c0_17, %c0_18, %c0_19] : memref<1x1x128xf32, #tpu.memory_space<vmem>>, vector<1x1x128xf32>
    tpu.vector_store %arg4[%c0_17, %c0_18, %c0_19], %43 {strides = array<i32>} : memref<1x1x128xf32, #tpu.memory_space<vmem>>, vector<1x1x128xf32>,
    return
  }
  func.func @transform_0(%arg0: i32, %arg1: i32) -> (i32, i32) {
    %c3_i32 = arith.constant 3 : i32
    %0 = arith.muli %arg0, %c3_i32 : i32
    %1 = arith.addi %0, %arg1 : i32
    %c2_i32 = arith.constant 2 : i32
    %2 = arith.minsi %1, %c2_i32 : i32
    %c0_i32 = arith.constant 0 : i32
    %c0_i32_0 = arith.constant 0 : i32
    return %2, %c0_i32 : i32, i32
  }
  func.func @transform_1(%arg0: i32, %arg1: i32) -> (i32, i32) {
    %c3_i32 = arith.constant 3 : i32
    %0 = arith.muli %arg0, %c3_i32 : i32
    %1 = arith.addi %0, %arg1 : i32
    %c0_i32 = arith.constant 0 : i32
    %c0_i32_0 = arith.constant 0 : i32
    return %1, %c0_i32 : i32, i32
  }
  func.func @transform_2(%arg0: i32, %arg1: i32) -> (i32, i32, i32) {
    %c0_i32 = arith.constant 0 : i32
    %c0_i32_0 = arith.constant 0 : i32
    %c0_i32_1 = arith.constant 0 : i32
    return %arg0, %c0_i32, %c0_i32_0 : i32, i32, i32
  }
}

</mosaic_0001>

<llo_original>
// kernel: tpu_custom_call.1
$region0: #{tpu_custom_call.1}
  #allocation0 [shape = 'u32[]', space=smem, size = 0x4, offset = 0x4, fixed_abs, tag = 'smem constant byte address 0x4 - core index']
  #allocation1 [shape = 'u32[144,128]{1,0:T(1,128)}', space=vmem, size = 0x12000, scoped, tag = 'internal scratch']
  %s0 = inlined_call_operand.vmem [shape: bf16[40,32], index: 0, kind: input, shape index: {}]
  %s1 = inlined_call_operand.vmem [shape: s32[48,1], index: 1, kind: input, shape index: {}]
  %s2 = inlined_call_operand.hbm [shape: f32[1,1,128], index: 2, kind: output, shape index: {}]
  %s3 = sld [smem:[#allocation0]]
  $region45: #{tpu_custom_call.1} parent=0
    _
  %s5 = ssub.s32 1, %s3
  %s6 = scalar_select 0, %s5, %s3
  $region1: #{tpu_custom_call.1} parent=0
    #allocation2 [shape = 'u8[512]{0}', space=vmem, size = 0x400, scoped, tag = 'output window, operand 0, single buffered']
    #allocation3 [shape = 's32[2]{0}', space=sflag, size = 0x8, scoped, tag = 'scoped memory for tpu_custom_call.1']
    %7 = vsyncpa [#allocation3], 0
    loop: start=0, step=1, limit=5
    $region2: #{tpu_custom_call.1} parent=1 // loop_pre_header
      _
    $region3: #{tpu_custom_call.1} parent=1 // loop_header
      %s9 = sphi 0, %s13
      %p10 = scmp.ge.s32.totalorder %s9, 5
      %s16 = sphi 0, %s28
      %s17 = sphi 0, %s24
      %s18 = sphi 0, %s16
      %s19 = sphi 0, %s17
      %s20 = sphi 0, %s18
      %s21 = sphi 0, %s19
      %s39 = sphi 0, %s41
      %s42 = sphi 0, %s39
      %s43 = sphi 0, %s42
      %s59 = sphi 0, %s43
      %s69 = sphi 0, %s71
      %s72 = sphi 0, %s69
      %s73 = sphi 0, %s72
      %s89 = sphi 0, %s73
      %s95 = sphi 0, %s97
      %s98 = sphi 0, %s95
      %s99 = sphi 0, %s98
      %s115 = sphi 0, %s99
    $region4: #{tpu_custom_call.1} parent=1 // loop_header_branch
      %12 = sbr.rel (%p10) target = $region8
    $region5: #{tpu_custom_call.1} parent=1 // loop_body
      %s14 = ssub.s32 %s9, 1
      %s15 = ssub.s32 %s9, 2
      %s22 = sadd.s32 1, %s17
      %p23 = scmp.ge.s32.totalorder %s22, 3
      %s24 = scalar_select %p23, 0, %s22
      %s25 = sadd.s32 1, %s16
      %s26 = scalar_select %p23, %s25, %s16
      %p27 = scmp.ge.s32.totalorder %s26, 1
      %s28 = scalar_select %p27, 0, %s26
      %s29 = smul.u32 %s16, 3
      %s30 = sadd.s32 %s29, %s17
      %p31 = scmp.lt.s32.totalorder %s30, 2
      %s32 = scalar_select %p31, %s30, 2
      %s33 = smul.u32 %s28, 3
      %s34 = sadd.s32 %s33, %s24
      %p35 = scmp.lt.s32.totalorder %s34, 2
      %s36 = scalar_select %p35, %s34, 2
      %s37 = ssub.s32 %s32, %s36
      %p38 = scmp.eq.s32.totalorder %s37, 0
      %s40 = sadd.s32 %s39, 1
      %s41 = scalar_select %p38, %s39, %s40
      %p44 = pneg %p38
      %p45 = scmp.eq.s32.totalorder %s9, 2
      %p46 = por %p44, %p45
      %p47 = scmp.ne.s32.totalorder %s39, %s42
      %p48 = scmp.eq.s32.totalorder %s9, 0
      %p49 = por %p47, %p48
      %p50 = scmp.ne.s32.totalorder %s39, %s42
      %p51 = scmp.eq.s32.totalorder %s14, 2
      %p52 = por %p50, %p51
      %p53 = scmp.ne.s32.totalorder %s42, %s43
      %p54 = scmp.eq.s32.totalorder %s14, 0
      %p55 = por %p53, %p54
      %p56 = scmp.ne.s32.totalorder %s42, %s43
      %p57 = scmp.eq.s32.totalorder %s15, 2
      %p58 = por %p56, %p57
      %p60 = scmp.ne.s32.totalorder %s43, %s59
      %p61 = scmp.eq.s32.totalorder %s15, 0
      %p62 = por %p60, %p61
      %s63 = smul.u32 %s16, 3
      %s64 = sadd.s32 %s63, %s17
      %s65 = smul.u32 %s28, 3
      %s66 = sadd.s32 %s65, %s24
      %s67 = ssub.s32 %s64, %s66
      %p68 = scmp.eq.s32.totalorder %s67, 0
      %s70 = sadd.s32 %s69, 1
      %s71 = scalar_select %p68, %s69, %s70
      %p74 = pneg %p68
      %p75 = scmp.eq.s32.totalorder %s9, 2
      %p76 = por %p74, %p75
      %p77 = scmp.ne.s32.totalorder %s69, %s72
      %p78 = scmp.eq.s32.totalorder %s9, 0
      %p79 = por %p77, %p78
      %p80 = scmp.ne.s32.totalorder %s69, %s72
      %p81 = scmp.eq.s32.totalorder %s14, 2
      %p82 = por %p80, %p81
      %p83 = scmp.ne.s32.totalorder %s72, %s73
      %p84 = scmp.eq.s32.totalorder %s14, 0
      %p85 = por %p83, %p84
      %p86 = scmp.ne.s32.totalorder %s72, %s73
      %p87 = scmp.eq.s32.totalorder %s15, 2
      %p88 = por %p86, %p87
      %p90 = scmp.ne.s32.totalorder %s73, %s89
      %p91 = scmp.eq.s32.totalorder %s15, 0
      %p92 = por %p90, %p91
      %s93 = ssub.s32 %s16, %s28
      %p94 = scmp.eq.s32.totalorder %s93, 0
      %s96 = sadd.s32 %s95, 1
      %s97 = scalar_select %p94, %s95, %s96
      %p100 = pneg %p94
      %p101 = scmp.eq.s32.totalorder %s9, 2
      %p102 = por %p100, %p101
      %p103 = scmp.ne.s32.totalorder %s95, %s98
      %p104 = scmp.eq.s32.totalorder %s9, 0
      %p105 = por %p103, %p104
      %p106 = scmp.ne.s32.totalorder %s95, %s98
      %p107 = scmp.eq.s32.totalorder %s14, 2
      %p108 = por %p106, %p107
      %p109 = scmp.ne.s32.totalorder %s98, %s99
      %p110 = scmp.eq.s32.totalorder %s14, 0
      %p111 = por %p109, %p110
      %p112 = scmp.ne.s32.totalorder %s98, %s99
      %p113 = scmp.eq.s32.totalorder %s15, 2
      %p114 = por %p112, %p113
      %p116 = scmp.ne.s32.totalorder %s99, %s115
      %p117 = scmp.eq.s32.totalorder %s15, 0
      %p118 = por %p116, %p117
      %p119 = scmp.le.s32.totalorder 1, %s9
      %p120 = scmp.lt.s32.totalorder %s9, 4
      %p121 = pnand %p119, %p120
      %p122 = pneg %p121
      // Predicated region
      $region9: #{tpu_custom_call.1} parent=5 // pred_check
        _
      $region10: #{tpu_custom_call.1} parent=5 // pred_check_branch
        %124 = sbr.rel (%p121) target = $region12
      $region11: #{tpu_custom_call.1} parent=5 // pred_region
        %s125 = ssub.s32 %s9, 1
      $region12: #{tpu_custom_call.1} parent=5 // pred_fallthru
        _
      %p126 = scmp.lt.s32.totalorder %s9, 3
      // Predicated region
      $region13: #{tpu_custom_call.1} parent=5 // pred_check
        %p127 = pneg %p126
      $region14: #{tpu_custom_call.1} parent=5 // pred_check_branch
        %129 = sbr.rel (%p127) target = $region16
      $region15: #{tpu_custom_call.1} parent=5 // pred_region
        // Predicated region
        $region17: #{tpu_custom_call.1} parent=15 // pred_check
          %p130 = pneg %p49
        $region18: #{tpu_custom_call.1} parent=15 // pred_check_branch
          %132 = sbr.rel (%p130) target = $region20
        $region19: #{tpu_custom_call.1} parent=15 // pred_region
          %s133 = smul.u32 %s16, 3
          %s134 = sadd.s32 %s133, %s17
          %p135 = scmp.lt.s32.totalorder %s134, 2
          %s136 = scalar_select %p135, %s134, 2
          %s137 = smul.u32 2, %s136
          %s138 = ssub.s32 5, %s137
          %p139 = scmp.lt.s32.totalorder %s138, 2
          %s140 = scalar_select %p139, %s138, 2
          %s141 = smul.u32 64, %s140
          %p142 = scmp.lt.s32.totalorder %s137, 4
          %s143 = scalar_select %p142, %s137, 4
          %s144 = smul.addr %s143, 4
          %s145 = scalar_lea.vmem %s0, %s144
          %s146 = smul.u32 %s16, 3
          %s147 = sadd.s32 %s146, %s17
          %p148 = scmp.lt.s32.totalorder %s147, 2
          %s149 = scalar_select %p148, %s147, 2
          %s150 = smul.u32 2, %s149
          %s151 = ssub.s32 5, %s150
          %p152 = scmp.lt.s32.totalorder %s151, 2
          %s153 = scalar_select %p152, %s151, 2
          %s154 = smul.u32 64, %s153
        $region20: #{tpu_custom_call.1} parent=15 // pred_fallthru
          _
        // Predicated region
        $region21: #{tpu_custom_call.1} parent=15 // pred_check
          %p155 = pneg %p79
        $region22: #{tpu_custom_call.1} parent=15 // pred_check_branch
          %157 = sbr.rel (%p155) target = $region24
        $region23: #{tpu_custom_call.1} parent=15 // pred_region
          %s158 = smul.u32 %s16, 3
          %s159 = sadd.s32 %s158, %s17
          %s160 = smul.u32 2, %s159
          %p161 = scmp.lt.s32.totalorder %s160, 5
          %s162 = scalar_select %p161, %s160, 5
          %s163 = smul.addr %s162, 8
          %s164 = scalar_lea.vmem %s1, %s163
          %s165 = smul.u32 %s16, 3
          %s166 = sadd.s32 %s165, %s17
          %s167 = smul.u32 2, %s166
        $region24: #{tpu_custom_call.1} parent=15 // pred_fallthru
          _
      $region16: #{tpu_custom_call.1} parent=5 // pred_fallthru
        _
      %p168 = scmp.le.s32.totalorder 1, %s9
      %p169 = scmp.lt.s32.totalorder %s9, 4
      %p170 = pnand %p168, %p169
      %p171 = pneg %p170
      // Predicated region
      $region25: #{tpu_custom_call.1} parent=5 // pred_check
        _
      $region26: #{tpu_custom_call.1} parent=5 // pred_check_branch
        %173 = sbr.rel (%p170) target = $region28
      $region27: #{tpu_custom_call.1} parent=5 // pred_region
        %s174 = ssub.s32 %s9, 1
        %s175 = smul.u32 %s18, 3
        %s176 = sadd.s32 %s175, %s19
        %p177 = scmp.lt.s32.totalorder %s176, 2
        %s178 = scalar_select %p177, %s176, 2
        %s179 = smul.u32 2, %s178
        %s180 = ssub.s32 5, %s179
        %p181 = scmp.lt.s32.totalorder %s180, 2
        %s182 = scalar_select %p181, %s180, 2
        %s183 = smul.u32 64, %s182
        %p184 = scmp.lt.s32.totalorder %s179, 4
        %s185 = scalar_select %p184, %s179, 4
        %s186 = smul.addr %s185, 4
        %s187 = scalar_lea.vmem %s0, %s186
        %p188 = pneg %p55
        %p189 = pneg %p52
        %s190 = smul.u32 %s18, 3
        %s191 = sadd.s32 %s190, %s19
        %s192 = smul.u32 2, %s191
        %p193 = scmp.lt.s32.totalorder %s192, 5
        %s194 = scalar_select %p193, %s192, 5
        %s195 = smul.addr %s194, 8
        %s196 = scalar_lea.vmem %s1, %s195
        %p197 = pneg %p85
        %p198 = pneg %p82
        %p199 = pneg %p111
        %p200 = pneg %p108
        %s201 = smul.u32 %s18, 3
        %s202 = sadd.s32 %s201, %s19
        %p203 = scmp.lt.s32.totalorder %s202, 2
        %s204 = scalar_select %p203, %s202, 2
        %s205 = smul.u32 2, %s204
        %s206 = ssub.s32 5, %s205
        %p207 = scmp.lt.s32.totalorder %s206, 2
        %s208 = scalar_select %p207, %s206, 2
        %s209 = smul.u32 64, %s208
        %p210 = scmp.lt.s32.totalorder %s205, 4
        %s211 = scalar_select %p210, %s205, 4
        %s212 = smul.addr %s211, 4
        %s213 = scalar_lea.vmem %s0, %s212
        %s214 = smul.u32 %s18, 3
        %s215 = sadd.s32 %s214, %s19
        %p216 = scmp.lt.s32.totalorder %s215, 2
        %s217 = scalar_select %p216, %s215, 2
        %s218 = smul.u32 2, %s217
        %s219 = ssub.s32 5, %s218
        %p220 = scmp.lt.s32.totalorder %s219, 2
        %s221 = scalar_select %p220, %s219, 2
        %s222 = smul.u32 64, %s221
        %s223 = smul.u32 %s18, 3
        %s224 = sadd.s32 %s223, %s19
        %s225 = smul.u32 2, %s224
        %p226 = scmp.lt.s32.totalorder %s225, 5
        %s227 = scalar_select %p226, %s225, 5
        %s228 = smul.addr %s227, 8
        %s229 = scalar_lea.vmem %s1, %s228
        %s230 = smul.u32 %s18, 3
        %s231 = sadd.s32 %s230, %s19
        %s232 = smul.u32 2, %s231
        %p233 = scmp.eq.s32.totalorder %s19, 0
        // Predicated region
        $region29: #{tpu_custom_call.1} parent=27 // pred_check
          %p234 = pneg %p233
        $region30: #{tpu_custom_call.1} parent=27 // pred_check_branch
          %236 = sbr.rel (%p234) target = $region32
        $region31: #{tpu_custom_call.1} parent=27 // pred_region
          %237 = vst [vmem:[#allocation2] sm:$0x1] 0.0
        $region32: #{tpu_custom_call.1} parent=27 // pred_fallthru
          _
        %v238 = vld [vmem:[%s213] sm:$0xf]
        %v239 = vld [vmem:[%s213 + $0x4] sm:$0xf]
        %v240 = vunpack.c.l.bf16 %v238
        %v241 = vunpack.c.l.bf16 %v239
        %v242 = vld [vmem:[%s229] sm:$0xff]
        %v243 = vld [vmem:[%s229 + $0x8] sm:$0xff]
        %v244 = vlaneseq
        %v245 = vand.u32 %v244, 127
        %vm246 = vcmask 261120
        %v247 = vsel %vm246, %v240, -inf
        %248 = vmax.xlane.f32.xlu0 %v247
        %v249 = vpop.xlane.xlu0 %248
        %v250 = vsel %vm246, %v241, -inf
        %251 = vmax.xlane.f32.xlu0 %v250
        %v252 = vpop.xlane.xlu0 %251
        %v253 = vsub.f32 %v240, %v249
        %v254 = vsub.f32 %v241, %v252
        %v255 = vmul.f32 %v253, 1.442695
        %v256 = vpow.pop %v255
        %v257 = vmul.f32 %v254, 1.442695
        %v258 = vpow.pop %v257
        %v259 = vsel %vm246, %v256, 0.0
        %260 = vadd.xlane.f32.xlu0 %v259
        %v261 = vpop.xlane.xlu0 %260
        %v262 = vsel %vm246, %v258, 0.0
        %263 = vadd.xlane.f32.xlu0 %v262
        %v264 = vpop.xlane.xlu0 %263
        %v265 = vlog2.pop %v261
        %v266 = vmul.f32 %v265, 0.6931472
        %v267 = vlog2.pop %v264
        %v268 = vmul.f32 %v267, 0.6931472
        %v269 = vadd.f32 %v266, %v249
        %v270 = vadd.f32 %v268, %v252
        %271 = vset.pattern.permute.xlu0 0
        %272 = vperm.xlu0 %271, %v242
        %v273 = vpop.permute.xlu0 %272
        %274 = vset.pattern.permute.xlu0 0
        %275 = vperm.xlu0 %274, %v243
        %v276 = vpop.permute.xlu0 %275
        %vm277 = vcmp.eq.s32.totalorder %v245, %v273
        %vm278 = vcmp.eq.s32.totalorder %v245, %v276
        %v279 = vsel %vm277, %v240, 0.0
        %v280 = vsel %vm278, %v241, 0.0
        %v281 = vsel %vm246, %v279, 0.0
        %282 = vadd.xlane.f32.xlu0 %v281
        %v283 = vpop.xlane.xlu0 %282
        %v284 = vsel %vm246, %v280, 0.0
        %285 = vadd.xlane.f32.xlu0 %v284
        %v286 = vpop.xlane.xlu0 %285
        %v287 = vsub.f32 %v283, %v269
        %v288 = vsub.f32 %v286, %v270
        %v289 = vsel %vm246, %v240, 0.0
        %290 = vadd.xlane.f32.xlu0 %v289
        %v291 = vpop.xlane.xlu0 %290
        %v292 = vsel %vm246, %v241, 0.0
        %293 = vadd.xlane.f32.xlu0 %v292
        %v294 = vpop.xlane.xlu0 %293
        %v295 = vmul.f32 %v269, 32.0
        %v296 = vmul.f32 %v270, 32.0
        %v297 = vsub.f32 %v291, %v295
        %v298 = vsub.f32 %v294, %v296
        %v299 = vmul.f32 %v287, -0.9
        %v300 = vmul.f32 %v288, -0.9
        %v301 = vmul.f32 %v297, 0.003125
        %v302 = vmul.f32 %v298, 0.003125
        %v303 = vsub.f32 %v299, %v301
        %v304 = vsub.f32 %v300, %v302
        %vm305 = vcmp.ge.s32.totalorder %v242, 0
        %vm306 = vcmp.ge.s32.totalorder %v243, 0
        %v307 = vld [vmem:[#allocation2] sm:$0x1]
        %v308 = vsel %vm305, %v303, 0.0
        %v309 = vsel %vm306, %v304, 0.0
        %vm310 = vcmask 7168
        %v311 = vsel %vm310, %v308, 0.0
        %v312 = vsel %vm310, %v309, 0.0
        %v313 = vadd.f32 %v311, %v312
        %314 = vadd.xlane.f32.xlu0 %v313
        %v315 = vpop.xlane.xlu0 %314
        %v316 = vrot.slane %v315, 4
        %v317 = vadd.f32 %v315, %v316
        %v318 = vrot.slane %v317, 2
        %v319 = vadd.f32 %v317, %v318
        %v320 = vrot.slane %v319, 1
        %v321 = vadd.f32 %v319, %v320
        %s322 = vtos %v321
        %v323 = vstv %s322
        %v324 = vadd.f32 %v307, %v323
        %325 = vst [vmem:[#allocation2] sm:$0x1] %v324
        // Predicated region
        $region33: #{tpu_custom_call.1} parent=27 // pred_check
          %p326 = pneg %p108
        $region34: #{tpu_custom_call.1} parent=27 // pred_check_branch
          %328 = sbr.rel (%p326) target = $region36
        $region35: #{tpu_custom_call.1} parent=27 // pred_region
          %s330 = ssub.s32 16, 16
          %331 = vsyncadd [#allocation3], %s330
          %s332 = smul.addr %s18, 16
          %s333 = scalar_lea.hbm %s2, %s332
          %s335 = sshll.u32 [#allocation2], 4
          %s336 = int_to_ptr.vmem [resolvable:$true] %s335
          %338 = dma.vmem_to_hbm [thread:$0]  %s336, 16, %s333, [#allocation3]
        $region36: #{tpu_custom_call.1} parent=27 // pred_fallthru
          _
        // Predicated region
        $region37: #{tpu_custom_call.1} parent=27 // pred_check
          %p339 = pneg %p108
        $region38: #{tpu_custom_call.1} parent=27 // pred_check_branch
          %341 = sbr.rel (%p339) target = $region40
        $region39: #{tpu_custom_call.1} parent=27 // pred_region
          %342 = dma.done [#allocation3], 16
        $region40: #{tpu_custom_call.1} parent=27 // pred_fallthru
          _
      $region28: #{tpu_custom_call.1} parent=5 // pred_fallthru
        _
      %p343 = scmp.le.s32.totalorder 2, %s9
      // Predicated region
      $region41: #{tpu_custom_call.1} parent=5 // pred_check
        %p344 = pneg %p343
      $region42: #{tpu_custom_call.1} parent=5 // pred_check_branch
        %346 = sbr.rel (%p344) target = $region44
      $region43: #{tpu_custom_call.1} parent=5 // pred_region
        %s347 = ssub.s32 %s9, 2
      $region44: #{tpu_custom_call.1} parent=5 // pred_fallthru
        _
    $region6: #{tpu_custom_call.1} parent=1 // loop_footer
      %s13 = sadd.s32 1, %s9
    $region7: #{tpu_custom_call.1} parent=1 // loop_footer_branch
      %8 = sbr.rel target = $region3
    $region8: #{tpu_custom_call.1} parent=1 // loop_exit
      _
    %348 = vsyncpa [#allocation3], 1
    %s349 = scalar_lea.sflag [#allocation3], 1
    %350 = vsyncpa %s349, 1

</llo_original>
